<compile_context>
chip_gen: v6e
topology: v6e:2x2x1
jax: 0.10.0
libtpu: 0.0.40
codegen_flags: <defaults>
</compile_context>

<pallas_src>
import jax
import jax.numpy as jnp
from jax.experimental import pallas as pl
from jax.experimental.pallas import tpu as pltpu


def _round_up(x, m):
    return ((x + m - 1) // m) * m


def _chip_traits():
    """(adjacency storage dtype, has 2 TensorCores per chip)."""
    kind = ""
    try:
        kind = jax.devices()[0].device_kind.lower()
    except Exception:
        pass
    if "v7" in kind or "7x" in kind:
        # v7x: fp8-native MXU, NO integer MXU path, 2 TCs/chip, 64 MiB VMEM.
        return jnp.float8_e4m3fn, True
    if "v5" in kind or "v6" in kind:
        # v5e/v6e: int8 storage halves the N^2 HBM stream; upcast to bf16 in VMEM.
        return jnp.int8, False
    # Unknown chip: safe bf16 fallback (still exact for 0/1 edges).
    return jnp.bfloat16, False


def _vmem_limit_bytes():
    cap = 64 * 1024 * 1024            # conservative default (works on v7x too)
    try:
        cap = int(pltpu.get_tpu_info().vmem_capacity_bytes)
    except Exception:
        pass
    # 75% of physical, capped: ~96 MiB on v5e/v6e (128 MiB), ~48 MiB on v7x (64 MiB).
    return int(min(cap * 3 // 4, 112 * 1024 * 1024))


# --------------------- stage 1: h = X @ W (computed once) ---------------------
def _linear_kernel(x_ref, w_ref, h_ref):
    h_ref[...] = jnp.dot(
        x_ref[...], w_ref[...], preferred_element_type=jnp.float32
    ).astype(h_ref.dtype)


# ------------- stage 2: mean neighbor aggregation + bias + ReLU ---------------
def _aggregate_kernel(adj_ref, h_ref, inv_ref, bias_ref, out_ref):
    k = pl.program_id(1)

    @pl.when(k == 0)
    def _():
        out_ref[...] = jnp.zeros_like(out_ref)       # f32 out block doubles as acc

    # adjacency stored narrow (int8 / fp8 / bf16, all exact for 0/1 edges);
    # upcast to bf16 in VMEM so the MXU runs a bf16 x bf16 -> f32 matmul.
    a = adj_ref[...].astype(jnp.bfloat16)
    out_ref[...] += jnp.dot(a, h_ref[...], preferred_element_type=jnp.float32)

    @pl.when(k == pl.num_programs(1) - 1)
    def _():
        # mean (exact precomputed 1/deg) + bias + ReLU, in place.
        out_ref[...] = jnp.maximum(
            out_ref[...] * inv_ref[...] + bias_ref[...], 0.0)


# ------------------------------ static planning -------------------------------
def make_plan(n_nodes, in_feats, out_feats):
    adj_dtype, multi_core = _chip_traits()
    adj_bytes = jnp.dtype(adj_dtype).itemsize
    vmem_limit = _vmem_limit_bytes()
    budget = int(vmem_limit * 0.6)                   # leave pipelining headroom

    f_out = _round_up(out_feats, 128)                # lane-dense output width

    def s2_bytes(tm, tk):                            # stage-2 VMEM working set
        return (2 * tm * tk * adj_bytes              # adj tiles (double-buffered)
                + 2 * tk * f_out * 2                 # h tiles (bf16)
                + 2 * tm * f_out * 4                 # resident f32 out block
                + 2 * tm * 4 + 2 * f_out * 4)        # 1/deg + bias

    # -- reduction (lane) tile: minimize column padding, then maximize tk --
    max_tk = min(2048, _round_up(n_nodes, 128))
    tk_cands = [t for t in range(128, max_tk + 1, 128) if s2_bytes(32, t) <= budget]
    if not tk_cands:
        tk_cands = [128]
    tk = min(tk_cands, key=lambda t: (_round_up(n_nodes, t), -t))
    n_cols = _round_up(n_nodes, tk)

    # -- row (sublane) tile: minimize modeled HBM traffic under the VMEM budget --
    max_tm = min(2048, _round_up(n_nodes, 32))
    feas = []
    for tm in range(32, max_tm + 1, 32):
        if s2_bytes(tm, tk) > budget:
            continue
        n_rows = _round_up(n_nodes, tm)
        tiles = n_rows // tm
        traffic = (n_rows * n_cols * adj_bytes       # adjacency stream
                   + tiles * n_cols * f_out * 2      # h re-read once per row tile
                   + n_rows * f_out * 4)             # output writeback
        feas.append((traffic, tm, n_rows, tiles))
    if not feas:
        n_rows = _round_up(n_nodes, 32)
        feas = [(0, 32, n_rows, n_rows // 32)]
    if multi_core and any(c[3] >= 2 for c in feas):
        # v7x: make sure the "parallel" row axis spans both TensorCores.
        feas = [c for c in feas if c[3] >= 2]
    feas.sort(key=lambda c: (c[0], -c[1]))
    _, tm, n_rows, _ = feas[0]

    # -- stage-1 tiles: row tile divides n_cols, f_out tile divides f_out --
    tn = max(t for t in range(128, min(512, f_out) + 1, 128) if f_out % t == 0)
    tr = 128
    for t in range(128, min(1024, n_cols) + 1, 128):
        if n_cols % t:
            continue
        if 2 * (t * in_feats * 2 + in_feats * tn * 2 + t * tn * 2) <= budget:
            tr = t

    return dict(adj_dtype=adj_dtype, adj_bytes=adj_bytes, vmem_limit=vmem_limit,
                n_nodes=n_nodes, in_feats=in_feats, out_feats=out_feats,
                f_out=f_out, tk=tk, n_cols=n_cols, tm=tm, n_rows=n_rows,
                tr=tr, tn=tn)


# --------------------------- one-time graph prepare ----------------------------
def prepare_graph(adj, plan):
    """Pad/narrow the dense adjacency and precompute exact 1/in-degree.

    Both are static per graph, so this N^2 pass is hoisted out of the per-call
    hot path (the old code re-padded and re-cast the adjacency on every call).
    """
    n = plan["n_nodes"]
    adj = adj.astype(jnp.float32)
    deg = jnp.sum(adj, axis=1, keepdims=True)
    inv = 1.0 / jnp.maximum(deg, 1.0)                # exact reciprocal, once
    inv_p = jnp.pad(inv, ((0, plan["n_rows"] - n), (0, 0)))
    adj_p = jnp.pad(adj, ((0, plan["n_rows"] - n), (0, plan["n_cols"] - n))
                    ).astype(plan["adj_dtype"])      # 0/1 is exact in int8/fp8/bf16
    return adj_p, inv_p


# --------------------------------- forward -------------------------------------
def modified_conv(feats, weight, bias, adj_p, inv_p, plan):
    n, fin, fout = plan["n_nodes"], plan["in_feats"], plan["out_feats"]
    f_out, tk, tm = plan["f_out"], plan["tk"], plan["tm"]
    n_cols, n_rows = plan["n_cols"], plan["n_rows"]
    tr, tn = plan["tr"], plan["tn"]
    vmem_limit = plan["vmem_limit"]

    # bf16 operands for the MXU; h stored bf16 so the N^2 stage streams half bytes.
    feats_p = jnp.pad(feats.astype(jnp.bfloat16), ((0, n_cols - n), (0, 0)))
    weight_p = jnp.pad(weight.astype(jnp.bfloat16), ((0, 0), (0, f_out - fout)))
    bias_p = jnp.pad(bias.astype(jnp.float32), (0, f_out - fout))[None, :]

    # ---- stage 1: h = X @ W, blocked over rows and f_out ----
    # TODO(synk): very large in_feats (>~8k) would also want a K grid axis with
    # an f32 accumulator; typical GCN widths fit a whole-K weight block in VMEM.
    h = pl.pallas_call(
        _linear_kernel,
        out_shape=jax.ShapeDtypeStruct((n_cols, f_out), jnp.bfloat16),
        grid_spec=pltpu.PrefetchScalarGridSpec(
            num_scalar_prefetch=0,
            grid=(n_cols // tr, f_out // tn),
            in_specs=[
                pl.BlockSpec((tr, fin), lambda r, j: (r, 0)),
                pl.BlockSpec((fin, tn), lambda r, j: (0, j)),
            ],
            out_specs=pl.BlockSpec((tr, tn), lambda r, j: (r, j)),
        ),
        compiler_params=pltpu.CompilerParams(
            dimension_semantics=("parallel", "parallel"),
            vmem_limit_bytes=vmem_limit,
        ),
        cost_estimate=pl.CostEstimate(
            flops=2 * n_cols * fin * f_out,
            transcendentals=0,
            bytes_accessed=n_cols * fin * 2 + fin * f_out * 2 + n_cols * f_out * 2,
        ),
    )(feats_p, weight_p)

    # ---- stage 2: tiled (i, k) mean aggregation over the adjacency ----
    out_p = pl.pallas_call(
        _aggregate_kernel,
        out_shape=jax.ShapeDtypeStruct((n_rows, f_out), jnp.float32),
        grid_spec=pltpu.PrefetchScalarGridSpec(
            num_scalar_prefetch=0,
            grid=(n_rows // tm, n_cols // tk),               # reduction axis last
            in_specs=[
                pl.BlockSpec((tm, tk), lambda i, k: (i, k)),      # adj tile
                pl.BlockSpec((tk, f_out), lambda i, k: (k, 0)),   # h tile
                pl.BlockSpec((tm, 1), lambda i, k: (i, 0)),       # 1/deg (resident)
                pl.BlockSpec((1, f_out), lambda i, k: (0, 0)),    # bias (resident)
            ],
            out_specs=pl.BlockSpec((tm, f_out), lambda i, k: (i, 0)),
        ),
        compiler_params=pltpu.CompilerParams(
            dimension_semantics=("parallel", "arbitrary"),
            vmem_limit_bytes=vmem_limit,
        ),
        cost_estimate=pl.CostEstimate(
            flops=2 * n_rows * n_cols * f_out,
            transcendentals=0,
            bytes_accessed=(n_rows * n_cols * plan["adj_bytes"]
                            + (n_rows // tm) * n_cols * f_out * 2
                            + n_rows * 4 + f_out * 4 + n_rows * f_out * 4),
        ),
    )(adj_p, h, inv_p, bias_p)

    return out_p[:n, :fout]


def reference(feats, weight, bias, adj):
    h = feats @ weight
    deg = jnp.maximum(jnp.sum(adj, axis=1, keepdims=True), 1.0)
    agg = (adj @ h) / deg
    return jnp.maximum(agg + bias[None, :], 0.0)


if __name__ == "__main__":
    key = jax.random.PRNGKey(0)
    k_feat, k_w, k_adj = jax.random.split(key, 3)

    N = 16          # number of graph nodes
    in_feats = 32
    out_feats = 32

    # Node features
    feats = jax.random.normal(k_feat, (N, in_feats), dtype=jnp.float32)

    # Parameters (deterministic): xavier_uniform_ weight, zeros bias
    bound = jnp.sqrt(6.0 / (in_feats + out_feats))
    weight = jax.random.uniform(k_w, (in_feats, out_feats), dtype=jnp.float32,
                                minval=-bound, maxval=bound)
    bias = jnp.zeros((out_feats,), dtype=jnp.float32)

    # Random directed graph as dense adjacency + self-loops
    adj = (jax.random.uniform(k_adj, (N, N)) < 0.25).astype(jnp.float32)
    adj = jnp.maximum(adj, jnp.eye(N, dtype=jnp.float32))

    plan = make_plan(N, in_feats, out_feats)
    adj_p, inv_p = prepare_graph(adj, plan)          # one-time per graph
    out = modified_conv(feats, weight, bias, adj_p, inv_p, plan)
    jax.block_until_ready(out)

    ref = reference(feats, weight, bias, adj)
    assert out.shape == (N, out_feats)
    # bf16 X/W/h on the MXU path => relaxed (but tight) tolerance; 1/deg is exact.
    assert jnp.allclose(out, ref, atol=2e-2, rtol=2e-2), \
        f"max abs diff {jnp.max(jnp.abs(out - ref))}"

    print("KERNEL_OK")
</pallas_src>

<mosaic_0001>
module attributes {stable_mosaic.version = 11 : i64} {
  func.func @_linear_kernel(%arg0: i32, %arg1: i32, %arg2: memref<128x32xbf16, #tpu.memory_space<vmem>>, %arg3: memref<32x128xbf16, #tpu.memory_space<vmem>>, %arg4: memref<128x128xbf16, #tpu.memory_space<vmem>>) attributes {dimension_semantics = [#tpu.dimension_semantics<parallel>, #tpu.dimension_semantics<parallel>], iteration_bounds = array<i64: 1, 1>, scalar_prefetch = 0 : i64, scratch_operands = 0 : i64, tpu.core_type = #tpu.core_type<tc>, window_params = [{transform_indices = @transform_0, window_bounds = array<i64: 128, 32>}, {transform_indices = @transform_1, window_bounds = array<i64: 32, 128>}, {transform_indices = @transform_2, window_bounds = array<i64: 128, 128>}]} {
    %c0 = arith.constant 0 : index
    %c0_0 = arith.constant 0 : index
    %0 = vector.load %arg2[%c0, %c0_0] : memref<128x32xbf16, #tpu.memory_space<vmem>>, vector<128x32xbf16>
    %c0_1 = arith.constant 0 : index
    %c0_2 = arith.constant 0 : index
    %1 = vector.load %arg3[%c0_1, %c0_2] : memref<32x128xbf16, #tpu.memory_space<vmem>>, vector<32x128xbf16>
    %cst = arith.constant dense<0.000000e+00> : vector<128x128xf32>
    %2 = tpu.matmul %0, %1, %cst {dimension_numbers = #tpu.dot_dimension_numbers<[1], [0], [0], [1], [0, 0, 1, 1], [], []>} : vector<128x32xbf16>, vector<32x128xbf16>, vector<128x128xf32> -> vector<128x128xf32>
    %3 = arith.truncf %2 : vector<128x128xf32> to vector<128x128xbf16>
    %c0_3 = arith.constant 0 : index
    %c0_4 = arith.constant 0 : index
    %4 = vector.load %arg4[%c0_3, %c0_4] : memref<128x128xbf16, #tpu.memory_space<vmem>>, vector<128x128xbf16>
    tpu.vector_store %arg4[%c0_3, %c0_4], %3 {strides = array<i32>} : memref<128x128xbf16, #tpu.memory_space<vmem>>, vector<128x128xbf16>,
    return
  }
  func.func @transform_0(%arg0: i32, %arg1: i32) -> (i32, i32) {
    %c0_i32 = arith.constant 0 : i32
    %c0_i32_0 = arith.constant 0 : i32
    return %arg0, %c0_i32 : i32, i32
  }
  func.func @transform_1(%arg0: i32, %arg1: i32) -> (i32, i32) {
    %c0_i32 = arith.constant 0 : i32
    %c0_i32_0 = arith.constant 0 : i32
    return %c0_i32, %arg1 : i32, i32
  }
  func.func @transform_2(%arg0: i32, %arg1: i32) -> (i32, i32) {
    %c0_i32 = arith.constant 0 : i32
    return %arg0, %arg1 : i32, i32
  }
}

</mosaic_0001>

<llo_original>
// kernel: tpu_custom_call.1
$region0: #{tpu_custom_call.1}
  #allocation0 [shape = 'u32[]', space=smem, size = 0x4, offset = 0x4, fixed_abs, tag = 'smem constant byte address 0x4 - core index']
  #allocation1 [shape = 'u32[144,128]{1,0:T(1,128)}', space=vmem, size = 0x12000, scoped, tag = 'internal scratch']
  %s0 = inlined_call_operand.vmem [shape: bf16[128,32], index: 0, kind: input, shape index: {}]
  %s1 = inlined_call_operand.vmem [shape: bf16[32,128], index: 1, kind: input, shape index: {}]
  %s2 = inlined_call_operand.hbm [shape: bf16[128,128], index: 2, kind: output, shape index: {}]
  %s3 = sld [smem:[#allocation0]]
  $region18: #{tpu_custom_call.1} parent=0
    _
  %s5 = ssub.s32 1, %s3
  %s6 = scalar_select 0, %s5, %s3
  $region1: #{tpu_custom_call.1} parent=0
    #allocation2 [shape = 'u8[32768]{0}', space=vmem, size = 0x8000, scoped, tag = 'output window, operand 0, single buffered']
    #allocation3 [shape = 's32[1]{0}', space=sflag, size = 0x4, scoped, tag = 'scoped memory for tpu_custom_call.1']
    %7 = vsyncpa [#allocation3], 0
    // Predicated region
    $region2: #{tpu_custom_call.1} parent=1 // pred_check
      _
    $region3: #{tpu_custom_call.1} parent=1 // pred_check_branch
      %9 = sbr.rel (0) target = $region5
    $region4: #{tpu_custom_call.1} parent=1 // pred_region
      _
    $region5: #{tpu_custom_call.1} parent=1 // pred_fallthru
      _
    // Predicated region
    $region6: #{tpu_custom_call.1} parent=1 // pred_check
      _
    $region7: #{tpu_custom_call.1} parent=1 // pred_check_branch
      %11 = sbr.rel (0) target = $region9
    $region8: #{tpu_custom_call.1} parent=1 // pred_region
      _
    $region9: #{tpu_custom_call.1} parent=1 // pred_fallthru
      _
    %v13 = vld [vmem:[%s0] sm:$0xf]
    %v14 = vld [vmem:[%s0 + $0x4] sm:$0xf]
    %v15 = vld [vmem:[%s0 + $0x8] sm:$0xf]
    %v16 = vld [vmem:[%s0 + $0xc] sm:$0xf]
    %v17 = vld [vmem:[%s0 + $0x10] sm:$0xf]
    %v18 = vld [vmem:[%s0 + $0x14] sm:$0xf]
    %v19 = vld [vmem:[%s0 + $0x18] sm:$0xf]
    %v20 = vld [vmem:[%s0 + $0x1c] sm:$0xf]
    %v21 = vld [vmem:[%s0 + $0x20] sm:$0xf]
    %v22 = vld [vmem:[%s0 + $0x24] sm:$0xf]
    %v23 = vld [vmem:[%s0 + $0x28] sm:$0xf]
    %v24 = vld [vmem:[%s0 + $0x2c] sm:$0xf]
    %v25 = vld [vmem:[%s0 + $0x30] sm:$0xf]
    %v26 = vld [vmem:[%s0 + $0x34] sm:$0xf]
    %v27 = vld [vmem:[%s0 + $0x38] sm:$0xf]
    %v28 = vld [vmem:[%s0 + $0x3c] sm:$0xf]
    %v29 = vld [vmem:[%s1] sm:$0xf]
    %v30 = vld [vmem:[%s1 + $0x4] sm:$0xf]
    %v31 = vld [vmem:[%s1 + $0x8] sm:$0xf]
    %v32 = vld [vmem:[%s1 + $0xc] sm:$0xf]
    %v49 = vunpack.c.l.b16 %v13
    %v50 = vunpack.c.l.b16 %v14
    %v51 = vunpack.c.l.b16 %v15
    %v52 = vunpack.c.l.b16 %v16
    %v53 = vunpack.c.l.b16 %v17
    %v54 = vunpack.c.l.b16 %v18
    %v55 = vunpack.c.l.b16 %v19
    %v56 = vunpack.c.l.b16 %v20
    %v57 = vunpack.c.l.b16 %v21
    %v58 = vunpack.c.l.b16 %v22
    %v59 = vunpack.c.l.b16 %v23
    %v60 = vunpack.c.l.b16 %v24
    %v61 = vunpack.c.l.b16 %v25
    %v62 = vunpack.c.l.b16 %v26
    %v63 = vunpack.c.l.b16 %v27
    %v64 = vunpack.c.l.b16 %v28
    %v65 = vpack.c.b16 %v50, %v49
    %v66 = vpack.c.b16 %v52, %v51
    %v67 = vpack.c.b16 %v54, %v53
    %v68 = vpack.c.b16 %v56, %v55
    %v69 = vpack.c.b16 %v58, %v57
    %v70 = vpack.c.b16 %v60, %v59
    %v71 = vpack.c.b16 %v62, %v61
    %v72 = vpack.c.b16 %v64, %v63
    %v77 = vunpack.c.l.b16 %v29
    %v78 = vunpack.c.l.b16 %v30
    %v79 = vunpack.c.l.b16 %v31
    %v80 = vunpack.c.l.b16 %v32
    %v81 = vpack.c.b16 %v78, %v77
    %v82 = vpack.c.b16 %v80, %v79
    %vm85 = vcmask 261120
    %v87 = vsel %vm85, %v65, 0
    %v90 = vsel %vm85, %v66, 0
    %v93 = vsel %vm85, %v67, 0
    %v96 = vsel %vm85, %v68, 0
    %v99 = vsel %vm85, %v69, 0
    %v102 = vsel %vm85, %v70, 0
    %v105 = vsel %vm85, %v71, 0
    %v108 = vsel %vm85, %v72, 0
    %110 = vmatprep.subr.bf16.mxu0 0
    %111 = vmatpush1.bf16.msra.mxu0 0
    %112 = vmatprep.subr.bf16.mxu0 0
    %113 = vmatpush1.bf16.msra.mxu0 0
    %114 = vmatprep.subr.bf16.mxu0 0
    %115 = vmatpush1.bf16.msra.mxu0 0
    %116 = vmatprep.subr.bf16.mxu0 0
    %117 = vmatpush1.bf16.msra.mxu0 0
    %118 = vmatprep.subr.bf16.mxu0 0
    %119 = vmatpush1.bf16.msra.mxu0 0
    %120 = vmatprep.subr.bf16.mxu0 0
    %121 = vmatpush1.bf16.msra.mxu0 0
    %122 = vmatprep.subr.bf16.mxu0 0
    %123 = vmatpush1.bf16.msra.mxu0 %v82
    %124 = vmatprep.subr.bf16.mxu0 0
    %125 = vmatpush1.bf16.msra.mxu0 %v81
    %126 = vmatprep.subr.bf16.mxu0 0
    %127 = vmatpush2.bf16.msra.mxu0 0
    %128 = vmatprep.subr.bf16.mxu0 0
    %129 = vmatpush2.bf16.msra.mxu0 0
    %130 = vmatprep.subr.bf16.mxu0 0
    %131 = vmatpush2.bf16.msra.mxu0 0
    %132 = vmatprep.subr.bf16.mxu0 0
    %133 = vmatpush2.bf16.msra.mxu0 0
    %134 = vmatprep.subr.bf16.mxu0 0
    %135 = vmatpush2.bf16.msra.mxu0 0
    %136 = vmatprep.subr.bf16.mxu0 0
    %137 = vmatpush2.bf16.msra.mxu0 0
    %138 = vmatprep.subr.bf16.mxu0 0
    %139 = vmatpush2.bf16.msra.mxu0 0
    %140 = vmatprep.subr.bf16.mxu0 0
    %141 = vmatpush2.bf16.msra.mxu0 0
    %142 = vmatprep.mubr.bf16.mxu0 0
    %143 = vmatmul.mubr.bf16.gmra.mxu0 %v87
    %v144 = vpop.f32.mrf.mxu0
    %v145 = vadd.f32 0.0, %v144
    %v146 = vpop.f32.mrf.mxu0
    %v147 = vpop.f32.mrf.mxu0
    %v148 = vadd.f32 0.0, %v147
    %v149 = vpop.f32.mrf.mxu0
    %150 = vmatprep.mubr.bf16.mxu0 0
    %151 = vmatmul.mubr.bf16.gmra.mxu0 %v90
    %v152 = vpop.f32.mrf.mxu0
    %v153 = vadd.f32 0.0, %v152
    %v154 = vpop.f32.mrf.mxu0
    %v155 = vpop.f32.mrf.mxu0
    %v156 = vadd.f32 0.0, %v155
    %v157 = vpop.f32.mrf.mxu0
    %158 = vmatprep.mubr.bf16.mxu0 0
    %159 = vmatmul.mubr.bf16.gmra.mxu0 %v93
    %v160 = vpop.f32.mrf.mxu0
    %v161 = vadd.f32 0.0, %v160
    %v162 = vpop.f32.mrf.mxu0
    %v163 = vpop.f32.mrf.mxu0
    %v164 = vadd.f32 0.0, %v163
    %v165 = vpop.f32.mrf.mxu0
    %166 = vmatprep.mubr.bf16.mxu0 0
    %167 = vmatmul.mubr.bf16.gmra.mxu0 %v96
    %v168 = vpop.f32.mrf.mxu0
    %v169 = vadd.f32 0.0, %v168
    %v170 = vpop.f32.mrf.mxu0
    %v171 = vpop.f32.mrf.mxu0
    %v172 = vadd.f32 0.0, %v171
    %v173 = vpop.f32.mrf.mxu0
    %174 = vmatprep.mubr.bf16.mxu0 0
    %175 = vmatmul.mubr.bf16.gmra.mxu0 %v99
    %v176 = vpop.f32.mrf.mxu0
    %v177 = vadd.f32 0.0, %v176
    %v178 = vpop.f32.mrf.mxu0
    %v179 = vpop.f32.mrf.mxu0
    %v180 = vadd.f32 0.0, %v179
    %v181 = vpop.f32.mrf.mxu0
    %182 = vmatprep.mubr.bf16.mxu0 0
    %183 = vmatmul.mubr.bf16.gmra.mxu0 %v102
    %v184 = vpop.f32.mrf.mxu0
    %v185 = vadd.f32 0.0, %v184
    %v186 = vpop.f32.mrf.mxu0
    %v187 = vpop.f32.mrf.mxu0
    %v188 = vadd.f32 0.0, %v187
    %v189 = vpop.f32.mrf.mxu0
    %190 = vmatprep.mubr.bf16.mxu0 0
    %191 = vmatmul.mubr.bf16.gmra.mxu0 %v105
    %v192 = vpop.f32.mrf.mxu0
    %v193 = vadd.f32 0.0, %v192
    %v194 = vpop.f32.mrf.mxu0
    %v195 = vpop.f32.mrf.mxu0
    %v196 = vadd.f32 0.0, %v195
    %v197 = vpop.f32.mrf.mxu0
    %198 = vmatprep.mubr.bf16.mxu0 0
    %199 = vmatmul.mubr.bf16.gmra.mxu0 %v108
    %v200 = vpop.f32.mrf.mxu0
    %v201 = vadd.f32 0.0, %v200
    %v202 = vpop.f32.mrf.mxu0
    %v203 = vpop.f32.mrf.mxu0
    %v204 = vadd.f32 0.0, %v203
    %v205 = vpop.f32.mrf.mxu0
    %206 = vdwg.mxu0
    %v207 = vpack.c.bf16 %v148, %v145
    %v208 = vpack.c.bf16 %v156, %v153
    %v209 = vpack.c.bf16 %v164, %v161
    %v210 = vpack.c.bf16 %v172, %v169
    %v211 = vpack.c.bf16 %v180, %v177
    %v212 = vpack.c.bf16 %v188, %v185
    %v213 = vpack.c.bf16 %v196, %v193
    %v214 = vpack.c.bf16 %v204, %v201
    %v223 = vunpack.c.l.b16 %v207
    %v224 = vunpack.c.h.b16 %v207
    %v225 = vunpack.c.l.b16 %v208
    %v226 = vunpack.c.h.b16 %v208
    %v227 = vunpack.c.l.b16 %v209
    %v228 = vunpack.c.h.b16 %v209
    %v229 = vunpack.c.l.b16 %v210
    %v230 = vunpack.c.h.b16 %v210
    %v231 = vunpack.c.l.b16 %v211
    %v232 = vunpack.c.h.b16 %v211
    %v233 = vunpack.c.l.b16 %v212
    %v234 = vunpack.c.h.b16 %v212
    %v235 = vunpack.c.l.b16 %v213
    %v236 = vunpack.c.h.b16 %v213
    %v237 = vunpack.c.l.b16 %v214
    %v238 = vunpack.c.h.b16 %v214
    %v239 = vpack.c.b16 %v223, %v223
    %v240 = vpack.c.b16 %v224, %v224
    %v241 = vpack.c.b16 %v225, %v225
    %v242 = vpack.c.b16 %v226, %v226
    %v243 = vpack.c.b16 %v227, %v227
    %v244 = vpack.c.b16 %v228, %v228
    %v245 = vpack.c.b16 %v229, %v229
    %v246 = vpack.c.b16 %v230, %v230
    %v247 = vpack.c.b16 %v231, %v231
    %v248 = vpack.c.b16 %v232, %v232
    %v249 = vpack.c.b16 %v233, %v233
    %v250 = vpack.c.b16 %v234, %v234
    %v251 = vpack.c.b16 %v235, %v235
    %v252 = vpack.c.b16 %v236, %v236
    %v253 = vpack.c.b16 %v237, %v237
    %v254 = vpack.c.b16 %v238, %v238
    %271 = vst [vmem:[#allocation2] sm:$0xf] %v239
    %272 = vst [vmem:[#allocation2 + $0x4] sm:$0xf] %v240
    %273 = vst [vmem:[#allocation2 + $0x8] sm:$0xf] %v241
    %274 = vst [vmem:[#allocation2 + $0xc] sm:$0xf] %v242
    %275 = vst [vmem:[#allocation2 + $0x10] sm:$0xf] %v243
    %276 = vst [vmem:[#allocation2 + $0x14] sm:$0xf] %v244
    %277 = vst [vmem:[#allocation2 + $0x18] sm:$0xf] %v245
    %278 = vst [vmem:[#allocation2 + $0x1c] sm:$0xf] %v246
    %279 = vst [vmem:[#allocation2 + $0x20] sm:$0xf] %v247
    %280 = vst [vmem:[#allocation2 + $0x24] sm:$0xf] %v248
    %281 = vst [vmem:[#allocation2 + $0x28] sm:$0xf] %v249
    %282 = vst [vmem:[#allocation2 + $0x2c] sm:$0xf] %v250
    %283 = vst [vmem:[#allocation2 + $0x30] sm:$0xf] %v251
    %284 = vst [vmem:[#allocation2 + $0x34] sm:$0xf] %v252
    %285 = vst [vmem:[#allocation2 + $0x38] sm:$0xf] %v253
    %286 = vst [vmem:[#allocation2 + $0x3c] sm:$0xf] %v254
    // Predicated region
    $region10: #{tpu_custom_call.1} parent=1 // pred_check
      _
    $region11: #{tpu_custom_call.1} parent=1 // pred_check_branch
      %288 = sbr.rel (0) target = $region13
    $region12: #{tpu_custom_call.1} parent=1 // pred_region
      %s290 = ssub.s32 1024, 1024
      %291 = vsyncadd [#allocation3], %s290
      %s292 = sshll.u32 [#allocation2], 4
      %s293 = int_to_ptr.vmem [resolvable:$true] %s292
      %298 = dma.vmem_to_hbm [thread:$0]  %s293, 1024, %s2, [#allocation3], 64, 64, 4
    $region13: #{tpu_custom_call.1} parent=1 // pred_fallthru
      _
    // Predicated region
    $region14: #{tpu_custom_call.1} parent=1 // pred_check
      _
    $region15: #{tpu_custom_call.1} parent=1 // pred_check_branch
      %300 = sbr.rel (0) target = $region17
    $region16: #{tpu_custom_call.1} parent=1 // pred_region
      %301 = dma.done [#allocation3], 1024
    $region17: #{tpu_custom_call.1} parent=1 // pred_fallthru
      _
    %302 = vsyncpa [#allocation3], 1

</llo_original>
